<compile_context>
chip_gen: v7x
topology: tpu7x:2x2x1
jax: 0.10.0
libtpu: 0.0.40
codegen_flags: <defaults>
</compile_context>

<pallas_src>
import functools

import jax
import jax.numpy as jnp
from jax import lax
from jax.experimental import pallas as pl
from jax.experimental.pallas import tpu as pltpu


# ---------------------------------------------------------------------------
# Pallas kernel: collapsed conv, single fused matmul per grid step.
# ---------------------------------------------------------------------------
def _crb_kernel(xg_ref, w_ref, b_ref, out_ref, tap_ref, *,
                k, wp, off0, lpad, nb, slot):
    """xg_ref : (Nb, C, Lin)        guarded, flat, spatially padded images
       w_ref  : (O, k*k*slot)       collapsed weight, zero in pad channel slots
       b_ref  : (O, 1)              conv_squeeze bias (f32)
       out_ref: (Nb, O, Lpad)       lane-dense (Lpad % 128 == 0) outputs
       tap_ref: (k*k*slot, Nb*Lpad) VMEM scratch holding the stacked taps
    """
    C = xg_ref.shape[1]
    if slot != C:
        # Pad rows of each tap slot are never written by the tap stores below;
        # keep them zero so (zero weight) x (pad row) can never produce NaN.
        tap_ref[...] = jnp.zeros(tap_ref.shape, tap_ref.dtype)

    for b in range(nb):
        xv = xg_ref[b]                       # (C, Lin): one lane-dense load
        col = b * lpad                       # multiple of 128
        for dy in range(k):
            for dx in range(k):
                t = dy * k + dx
                s = off0 + dy * wp + dx      # static lane shift
                tap_ref[pl.ds(t * slot, C), pl.ds(col, lpad)] = xv[:, s:s + lpad]

    # Single fused matmul: K = k*k*slot (vs k*k tiny K=C dots before).
    y = jnp.dot(w_ref[...], tap_ref[...], preferred_element_type=jnp.float32)
    y = jnp.clip(y + b_ref[...], 0.0, 1.0)   # bias + Hardtanh(0, 1), f32 epilogue

    for b in range(nb):
        out_ref[b] = y[:, b * lpad:(b + 1) * lpad].astype(out_ref.dtype)


def compressed_residual_block(x, w_expand, w_squeeze, b_squeeze, *,
                              use_bf16=False, num_grid_steps=2):
    """Forward pass of CompressedResidualBlock (activation='clipped').

    x:          (N, C, H, W)  float32   (NCHW, like PyTorch)
    w_expand:   (T, C, k, k)  float32   (conv_expand weight, no bias)
    w_squeeze:  (O, T, 1, 1)  float32   (conv_squeeze weight)
    b_squeeze:  (O,)          float32   (conv_squeeze bias)
    returns:    (N, O, H, W)  float32
    """
    N, C, H, W = x.shape
    T, _, k, _ = w_expand.shape
    O = w_squeeze.shape[0]
    assert k % 2 == 1, "even kernel_size diverges from PyTorch 'same' padding"
    p = (k - 1) // 2

    Hp, Wp = H + 2 * p, W + 2 * p
    L = Hp * Wp                                   # padded-flat output extent
    Lpad = -(-L // 128) * 128                     # lane-dense output per image
    KK = k * k
    SLOT = -(-C // 8) * 8                         # sublane-aligned tap slot

    # Fold the flat guard for the tap shifts into the row padding: with
    # pt = 2p+1 top rows the first tap (dy=dx=0) starts at off0 = Wp - p >= 0.
    pt = 2 * p + 1
    off0 = Wp - p
    max_read = off0 + (k - 1) * (Wp + 1) + Lpad   # exclusive upper read bound
    pb = max(-(-max_read // Wp) - H - pt, p)      # bottom rows (>= conv pad)
    Lin = (H + pt + pb) * Wp

    steps = max(1, min(num_grid_steps, N))        # >=2 parallel steps on v7x
    Nb = -(-N // steps)
    N_pad = Nb * steps

    # ---- glue: ONE XLA-side pad (batch pad + spatial pad + flat guard) ----
    compute_dtype = jnp.bfloat16 if use_bf16 else x.dtype
    xp = jnp.pad(x.astype(compute_dtype),
                 ((0, N_pad - N), (0, 0), (pt, pb), (p, p)))
    xg = xp.reshape(N_pad, C, Lin)

    # Pre-collapse the two linear layers (PyTorch's collapse() path):
    # w_eff[o,c,dy,dx] = sum_t w_squeeze[o,t] * w_expand[t,c,dy,dx]
    w_eff = jnp.einsum('ot,tcyx->ocyx', w_squeeze.reshape(O, T), w_expand)
    w_taps = w_eff.transpose(0, 2, 3, 1).reshape(O, KK, C)     # (O, KK, C)
    w_flat = jnp.pad(w_taps, ((0, 0), (0, 0), (0, SLOT - C)))  # zero pad slots
    w_flat = w_flat.reshape(O, KK * SLOT).astype(compute_dtype)
    bias = b_squeeze.reshape(O, 1).astype(jnp.float32)

    kernel = functools.partial(_crb_kernel, k=k, wp=Wp, off0=off0,
                               lpad=Lpad, nb=Nb, slot=SLOT)

    flops = 2 * N_pad * Lpad * KK * SLOT * O
    bytes_accessed = (xg.size * xg.dtype.itemsize
                      + w_flat.size * w_flat.dtype.itemsize
                      + bias.size * bias.dtype.itemsize
                      + N_pad * O * Lpad * x.dtype.itemsize)

    out_flat = pl.pallas_call(
        kernel,
        out_shape=jax.ShapeDtypeStruct((N_pad, O, Lpad), x.dtype),
        grid_spec=pltpu.PrefetchScalarGridSpec(
            num_scalar_prefetch=0,
            grid=(steps,),
            in_specs=[
                pl.BlockSpec((Nb, C, Lin), lambda i: (i, 0, 0)),   # Nb images
                pl.BlockSpec((O, KK * SLOT), lambda i: (0, 0)),    # weights
                pl.BlockSpec((O, 1), lambda i: (0, 0)),            # bias
            ],
            out_specs=pl.BlockSpec((Nb, O, Lpad), lambda i: (i, 0, 0)),
            scratch_shapes=[pltpu.VMEM((KK * SLOT, Nb * Lpad), compute_dtype)],
        ),
        compiler_params=pltpu.CompilerParams(
            dimension_semantics=("parallel",)),
        cost_estimate=pl.CostEstimate(
            flops=flops, transcendentals=0, bytes_accessed=bytes_accessed),
    )(xg, w_flat, bias)

    # Padded-flat coordinates -> NCHW, dropping batch pad, lane pad, pad ring.
    out = out_flat[:N, :, :L].reshape(N, O, Hp, Wp)[:, :, p:p + H, p:p + W]
    return out


# ---------------------------------------------------------------------------
# Deterministic parameter construction (mirrors __init__ + initialize()).
# ---------------------------------------------------------------------------
def init_params(key, in_channels, out_channels, tmp_channels, kernel_size):
    k1, k2, k3 = jax.random.split(key, 3)
    k = kernel_size
    bound_e = 1.0 / jnp.sqrt(in_channels * k * k)
    w_expand = jax.random.uniform(
        k1, (tmp_channels, in_channels, k, k), jnp.float32, -bound_e, bound_e)
    bound_s = 1.0 / jnp.sqrt(float(tmp_channels))
    w_squeeze = jax.random.uniform(
        k2, (out_channels, tmp_channels, 1, 1), jnp.float32, -bound_s, bound_s)
    b_squeeze = jax.random.uniform(
        k3, (out_channels,), jnp.float32, -bound_s, bound_s)

    # CompressedResidualBlock.initialize(): +1.0 at the kernel center on the
    # channel diagonal of conv_expand.
    mid = k // 2
    n_res = min(in_channels, tmp_channels)
    idx = jnp.arange(n_res)
    w_expand = w_expand.at[idx, idx, mid, mid].add(1.0)
    return w_expand, w_squeeze, b_squeeze


# Pure-JAX reference (two lax convs, non-collapsed) for correctness checks.
def reference_forward(x, w_expand, w_squeeze, b_squeeze):
    k = w_expand.shape[-1]
    pad = (k - 1) // 2
    h = lax.conv_general_dilated(
        x, w_expand, window_strides=(1, 1), padding=[(pad, pad), (pad, pad)],
        dimension_numbers=("NCHW", "OIHW", "NCHW"))
    y = lax.conv_general_dilated(
        h, w_squeeze, window_strides=(1, 1), padding=[(0, 0), (0, 0)],
        dimension_numbers=("NCHW", "OIHW", "NCHW"))
    y = y + b_squeeze[None, :, None, None]
    return jnp.clip(y, 0.0, 1.0)


if __name__ == "__main__":
    key = jax.random.PRNGKey(0)
    k_x1, k_p1, k_x2, k_p2 = jax.random.split(key, 4)

    # batch=2, in_channels=4, out_channels=4, tmp_channels=8, spatial 16x16,
    # kernel_size=3, activation='clipped' (the module default).
    N, C_IN, C_OUT, C_TMP, H, W, K = 2, 4, 4, 8, 16, 16, 3
    x = jax.random.normal(k_x1, (N, C_IN, H, W), jnp.float32)
    w_expand, w_squeeze, b_squeeze = init_params(k_p1, C_IN, C_OUT, C_TMP, K)
    ref = reference_forward(x, w_expand, w_squeeze, b_squeeze)

    # f32 operand path (tight check: collapsed weights differ from the
    # two-conv reference only at fp32 rounding level).
    out = jax.block_until_ready(
        compressed_residual_block(x, w_expand, w_squeeze, b_squeeze))
    assert out.shape == (N, C_OUT, H, W)
    assert jnp.allclose(out, ref, atol=1e-4, rtol=1e-4), "f32 mismatch vs reference"

    # bf16 operand path (v6e/v7x fast path; f32 accumulation + f32 epilogue).
    out_bf16 = jax.block_until_ready(
        compressed_residual_block(x, w_expand, w_squeeze, b_squeeze,
                                  use_bf16=True))
    assert jnp.allclose(out_bf16, ref, atol=5e-2, rtol=0.0), \
        "bf16 mismatch vs reference"

    # Guard/crop invariant check: W != H, k=5 (p=2), odd batch (exercises the
    # batch padding and Nb=2 folding paths).
    N2, C2_IN, C2_OUT, C2_TMP, H2, W2, K2 = 3, 3, 5, 6, 12, 20, 5
    x2 = jax.random.normal(k_x2, (N2, C2_IN, H2, W2), jnp.float32)
    w_e2, w_s2, b_s2 = init_params(k_p2, C2_IN, C2_OUT, C2_TMP, K2)
    out2 = jax.block_until_ready(
        compressed_residual_block(x2, w_e2, w_s2, b_s2))
    ref2 = reference_forward(x2, w_e2, w_s2, b_s2)
    assert out2.shape == (N2, C2_OUT, H2, W2)
    assert jnp.allclose(out2, ref2, atol=1e-4, rtol=1e-4), \
        "W!=H / k=5 mismatch vs reference"

    print("KERNEL_OK")
</pallas_src>

<mosaic_0001>
module attributes {stable_mosaic.version = 11 : i64} {
  func.func @_crb_kernel(%arg0: i32, %arg1: memref<1x4x450xf32, #tpu.memory_space<vmem>>, %arg2: memref<4x72xf32, #tpu.memory_space<vmem>>, %arg3: memref<4x1xf32, #tpu.memory_space<vmem>>, %arg4: memref<1x4x384xf32, #tpu.memory_space<vmem>>, %arg5: memref<72x384xf32, #tpu.memory_space<vmem>>) attributes {dimension_semantics = [#tpu.dimension_semantics<parallel>], iteration_bounds = array<i64: 2>, scalar_prefetch = 0 : i64, scratch_operands = 1 : i64, tpu.core_type = #tpu.core_type<tc>, window_params = [{transform_indices = @transform_0, window_bounds = array<i64: 1, 4, 450>}, {pipeline_mode = #tpu.pipeline_mode<synchronous>, transform_indices = @transform_1, window_bounds = array<i64: 4, 72>}, {pipeline_mode = #tpu.pipeline_mode<synchronous>, transform_indices = @transform_2, window_bounds = array<i64: 4, 1>}, {transform_indices = @transform_3, window_bounds = array<i64: 1, 4, 384>}]} {
    %cst = arith.constant 0.000000e+00 : f32
    %0 = vector.broadcast %cst : f32 to vector<72x384xf32>
    %c0 = arith.constant 0 : index
    %c0_0 = arith.constant 0 : index
    %1 = vector.load %arg5[%c0, %c0_0] : memref<72x384xf32, #tpu.memory_space<vmem>>, vector<72x384xf32>
    tpu.vector_store %arg5[%c0, %c0_0], %0 {strides = array<i32>} : memref<72x384xf32, #tpu.memory_space<vmem>>, vector<72x384xf32>,
    %c0_1 = arith.constant 0 : index
    %c0_2 = arith.constant 0 : index
    %c0_3 = arith.constant 0 : index
    %2 = vector.load %arg1[%c0_1, %c0_2, %c0_3] : memref<1x4x450xf32, #tpu.memory_space<vmem>>, vector<1x4x450xf32>
    %3 = vector.shape_cast %2 : vector<1x4x450xf32> to vector<4x450xf32>
    %4 = vector.extract_strided_slice %3 {offsets = [0, 17], sizes = [4, 384], strides = [1, 1]} : vector<4x450xf32> to vector<4x384xf32>
    %c0_4 = arith.constant 0 : index
    %c0_5 = arith.constant 0 : index
    %5 = vector.load %arg5[%c0_4, %c0_5] : memref<72x384xf32, #tpu.memory_space<vmem>>, vector<4x384xf32>
    tpu.vector_store %arg5[%c0_4, %c0_5], %4 {strides = array<i32>} : memref<72x384xf32, #tpu.memory_space<vmem>>, vector<4x384xf32>,
    %6 = vector.extract_strided_slice %3 {offsets = [0, 18], sizes = [4, 384], strides = [1, 1]} : vector<4x450xf32> to vector<4x384xf32>
    %c8 = arith.constant 8 : index
    %c0_6 = arith.constant 0 : index
    %7 = vector.load %arg5[%c8, %c0_6] : memref<72x384xf32, #tpu.memory_space<vmem>>, vector<4x384xf32>
    tpu.vector_store %arg5[%c8, %c0_6], %6 {strides = array<i32>} : memref<72x384xf32, #tpu.memory_space<vmem>>, vector<4x384xf32>,
    %8 = vector.extract_strided_slice %3 {offsets = [0, 19], sizes = [4, 384], strides = [1, 1]} : vector<4x450xf32> to vector<4x384xf32>
    %c16 = arith.constant 16 : index
    %c0_7 = arith.constant 0 : index
    %9 = vector.load %arg5[%c16, %c0_7] : memref<72x384xf32, #tpu.memory_space<vmem>>, vector<4x384xf32>
    tpu.vector_store %arg5[%c16, %c0_7], %8 {strides = array<i32>} : memref<72x384xf32, #tpu.memory_space<vmem>>, vector<4x384xf32>,
    %10 = vector.extract_strided_slice %3 {offsets = [0, 35], sizes = [4, 384], strides = [1, 1]} : vector<4x450xf32> to vector<4x384xf32>
    %c24 = arith.constant 24 : index
    %c0_8 = arith.constant 0 : index
    %11 = vector.load %arg5[%c24, %c0_8] : memref<72x384xf32, #tpu.memory_space<vmem>>, vector<4x384xf32>
    tpu.vector_store %arg5[%c24, %c0_8], %10 {strides = array<i32>} : memref<72x384xf32, #tpu.memory_space<vmem>>, vector<4x384xf32>,
    %12 = vector.extract_strided_slice %3 {offsets = [0, 36], sizes = [4, 384], strides = [1, 1]} : vector<4x450xf32> to vector<4x384xf32>
    %c32 = arith.constant 32 : index
    %c0_9 = arith.constant 0 : index
    %13 = vector.load %arg5[%c32, %c0_9] : memref<72x384xf32, #tpu.memory_space<vmem>>, vector<4x384xf32>
    tpu.vector_store %arg5[%c32, %c0_9], %12 {strides = array<i32>} : memref<72x384xf32, #tpu.memory_space<vmem>>, vector<4x384xf32>,
    %14 = vector.extract_strided_slice %3 {offsets = [0, 37], sizes = [4, 384], strides = [1, 1]} : vector<4x450xf32> to vector<4x384xf32>
    %c40 = arith.constant 40 : index
    %c0_10 = arith.constant 0 : index
    %15 = vector.load %arg5[%c40, %c0_10] : memref<72x384xf32, #tpu.memory_space<vmem>>, vector<4x384xf32>
    tpu.vector_store %arg5[%c40, %c0_10], %14 {strides = array<i32>} : memref<72x384xf32, #tpu.memory_space<vmem>>, vector<4x384xf32>,
    %16 = vector.extract_strided_slice %3 {offsets = [0, 53], sizes = [4, 384], strides = [1, 1]} : vector<4x450xf32> to vector<4x384xf32>
    %c48 = arith.constant 48 : index
    %c0_11 = arith.constant 0 : index
    %17 = vector.load %arg5[%c48, %c0_11] : memref<72x384xf32, #tpu.memory_space<vmem>>, vector<4x384xf32>
    tpu.vector_store %arg5[%c48, %c0_11], %16 {strides = array<i32>} : memref<72x384xf32, #tpu.memory_space<vmem>>, vector<4x384xf32>,
    %18 = vector.extract_strided_slice %3 {offsets = [0, 54], sizes = [4, 384], strides = [1, 1]} : vector<4x450xf32> to vector<4x384xf32>
    %c56 = arith.constant 56 : index
    %c0_12 = arith.constant 0 : index
    %19 = vector.load %arg5[%c56, %c0_12] : memref<72x384xf32, #tpu.memory_space<vmem>>, vector<4x384xf32>
    tpu.vector_store %arg5[%c56, %c0_12], %18 {strides = array<i32>} : memref<72x384xf32, #tpu.memory_space<vmem>>, vector<4x384xf32>,
    %20 = vector.extract_strided_slice %3 {offsets = [0, 55], sizes = [4, 384], strides = [1, 1]} : vector<4x450xf32> to vector<4x384xf32>
    %c64 = arith.constant 64 : index
    %c0_13 = arith.constant 0 : index
    %21 = vector.load %arg5[%c64, %c0_13] : memref<72x384xf32, #tpu.memory_space<vmem>>, vector<4x384xf32>
    tpu.vector_store %arg5[%c64, %c0_13], %20 {strides = array<i32>} : memref<72x384xf32, #tpu.memory_space<vmem>>, vector<4x384xf32>,
    %c0_14 = arith.constant 0 : index
    %c0_15 = arith.constant 0 : index
    %22 = vector.load %arg2[%c0_14, %c0_15] : memref<4x72xf32, #tpu.memory_space<vmem>>, vector<4x72xf32>
    %c0_16 = arith.constant 0 : index
    %c0_17 = arith.constant 0 : index
    %23 = vector.load %arg5[%c0_16, %c0_17] : memref<72x384xf32, #tpu.memory_space<vmem>>, vector<72x384xf32>
    %cst_18 = arith.constant dense<0.000000e+00> : vector<4x384xf32>
    %24 = tpu.matmul %22, %23, %cst_18 {dimension_numbers = #tpu.dot_dimension_numbers<[1], [0], [0], [1], [0, 0, 1, 1], [], []>} : vector<4x72xf32>, vector<72x384xf32>, vector<4x384xf32> -> vector<4x384xf32>
    %c0_19 = arith.constant 0 : index
    %c0_20 = arith.constant 0 : index
    %25 = vector.load %arg3[%c0_19, %c0_20] : memref<4x1xf32, #tpu.memory_space<vmem>>, vector<4x1xf32>
    %26 = vector.broadcast %25 : vector<4x1xf32> to vector<4x384xf32>
    %27 = arith.addf %24, %26 : vector<4x384xf32>
    %cst_21 = arith.constant 0.000000e+00 : f32
    %cst_22 = arith.constant 1.000000e+00 : f32
    %28 = vector.broadcast %cst_21 : f32 to vector<4x384xf32>
    %29 = arith.maximumf %28, %27 : vector<4x384xf32>
    %30 = vector.broadcast %cst_22 : f32 to vector<4x384xf32>
    %31 = arith.minimumf %30, %29 : vector<4x384xf32>
    %c0_23 = arith.constant 0 : index
    %c0_24 = arith.constant 0 : index
    %c0_25 = arith.constant 0 : index
    %32 = vector.load %arg4[%c0_23, %c0_24, %c0_25] : memref<1x4x384xf32, #tpu.memory_space<vmem>>, vector<1x4x384xf32>
    %33 = vector.shape_cast %32 : vector<1x4x384xf32> to vector<4x384xf32>
    %34 = vector.shape_cast %31 : vector<4x384xf32> to vector<1x4x384xf32>
    tpu.vector_store %arg4[%c0_23, %c0_24, %c0_25], %34 {strides = array<i32>} : memref<1x4x384xf32, #tpu.memory_space<vmem>>, vector<1x4x384xf32>,
    return
  }
  func.func @transform_0(%arg0: i32) -> (i32, i32, i32) {
    %c0_i32 = arith.constant 0 : i32
    %c0_i32_0 = arith.constant 0 : i32
    %c0_i32_1 = arith.constant 0 : i32
    return %arg0, %c0_i32, %c0_i32_0 : i32, i32, i32
  }
  func.func @transform_1(%arg0: i32) -> (i32, i32) {
    %c0_i32 = arith.constant 0 : i32
    %c0_i32_0 = arith.constant 0 : i32
    %c0_i32_1 = arith.constant 0 : i32
    return %c0_i32, %c0_i32_0 : i32, i32
  }
  func.func @transform_2(%arg0: i32) -> (i32, i32) {
    %c0_i32 = arith.constant 0 : i32
    %c0_i32_0 = arith.constant 0 : i32
    %c0_i32_1 = arith.constant 0 : i32
    return %c0_i32, %c0_i32_0 : i32, i32
  }
  func.func @transform_3(%arg0: i32) -> (i32, i32, i32) {
    %c0_i32 = arith.constant 0 : i32
    %c0_i32_0 = arith.constant 0 : i32
    %c0_i32_1 = arith.constant 0 : i32
    return %arg0, %c0_i32, %c0_i32_0 : i32, i32, i32
  }
}

</mosaic_0001>

<llo_original>
// kernel: tpu_custom_call.1
$region0: #{tpu_custom_call.1}
  #allocation0 [shape = 'u32[]', space=smem, size = 0x4, offset = 0x4, fixed_abs, tag = 'smem constant byte address 0x4 - core index']
  #allocation1 [shape = 'u32[144,128]{1,0:T(1,128)}', space=vmem, size = 0x12000, scoped, tag = 'internal scratch']
  #allocation2 [shape = 'f32[72,384]{1,0:T(8,128)}', space=vmem, size = 0x1b000, scoped, tag = 'scratch operand']
  %s0 = inlined_call_operand.hbm [shape: f32[2,4,450], index: 0, kind: input, shape index: {}]
  %s1 = inlined_call_operand.vmem [shape: f32[4,72], index: 1, kind: input, shape index: {}]
  %s2 = inlined_call_operand.vmem [shape: f32[4,1], index: 2, kind: input, shape index: {}]
  %s3 = inlined_call_operand.hbm [shape: f32[2,4,384], index: 3, kind: output, shape index: {}]
  %s4 = sld [smem:[#allocation0]]
  $region49: #{tpu_custom_call.1} parent=0
    _
  %s6 = ssub.s32 1, %s4
  %s7 = scalar_select 0, %s6, %s4
  $region1: #{tpu_custom_call.1} parent=0
    #allocation3 [shape = 'u8[16384]{0}', space=vmem, size = 0x4000, scoped, tag = 'input window, operand 0']
    #allocation4 [shape = 's32[2]{0}', space=sflag, size = 0x8, scoped, tag = 'scoped memory for tpu_custom_call.1']
    #allocation5 [shape = 's32[2]{0}', space=sflag, size = 0x8, scoped, tag = 'scoped memory for tpu_custom_call.1']
    #allocation6 [shape = 'u8[12288]{0}', space=vmem, size = 0x3000, scoped, tag = 'output window, operand 0']
    %8 = vsyncpa [#allocation4], 0
    %s9 = scalar_lea.sflag [#allocation4], 1
    %10 = vsyncpa %s9, 0
    %11 = vsyncpa [#allocation5], 0
    %s12 = scalar_lea.sflag [#allocation5], 1
    %13 = vsyncpa %s12, 0
    loop: start=0, step=1, limit=4
    $region2: #{tpu_custom_call.1} parent=1 // loop_pre_header
      _
    $region3: #{tpu_custom_call.1} parent=1 // loop_header
      %s15 = sphi 0, %s19
      %p16 = scmp.ge.s32.totalorder %s15, 4
      %s25 = sphi 0, %s27
      %s28 = sphi 0, %s25
      %s29 = sphi 0, %s28
      %s45 = sphi 0, %s29
      %s49 = sphi 0, %s49
      %s51 = sphi 0, %s49
      %s52 = sphi 0, %s51
      %s66 = sphi 0, %s52
      %s70 = sphi 0, %s70
      %s72 = sphi 0, %s70
      %s73 = sphi 0, %s72
      %s87 = sphi 0, %s73
      %s93 = sphi 0, %s95
      %s96 = sphi 0, %s93
      %s97 = sphi 0, %s96
      %s113 = sphi 0, %s97
    $region4: #{tpu_custom_call.1} parent=1 // loop_header_branch
      %18 = sbr.rel (%p16) target = $region8
    $region5: #{tpu_custom_call.1} parent=1 // loop_body
      %s20 = ssub.s32 %s15, 1
      %s21 = ssub.s32 %s15, 2
      %s22 = sadd.s32 %s15, 1
      %s23 = ssub.s32 %s15, %s22
      %p24 = scmp.eq.s32.totalorder %s23, 0
      %s26 = sadd.s32 %s25, 1
      %s27 = scalar_select %p24, %s25, %s26
      %p30 = pneg %p24
      %p31 = scmp.eq.s32.totalorder %s15, 1
      %p32 = por %p30, %p31
      %p33 = scmp.ne.s32.totalorder %s25, %s28
      %p34 = scmp.eq.s32.totalorder %s15, 0
      %p35 = por %p33, %p34
      %p36 = scmp.ne.s32.totalorder %s25, %s28
      %p37 = scmp.eq.s32.totalorder %s20, 1
      %p38 = por %p36, %p37
      %p39 = scmp.ne.s32.totalorder %s28, %s29
      %p40 = scmp.eq.s32.totalorder %s20, 0
      %p41 = por %p39, %p40
      %p42 = scmp.ne.s32.totalorder %s28, %s29
      %p43 = scmp.eq.s32.totalorder %s21, 1
      %p44 = por %p42, %p43
      %p46 = scmp.ne.s32.totalorder %s29, %s45
      %p47 = scmp.eq.s32.totalorder %s21, 0
      %p48 = por %p46, %p47
      %s50 = sadd.s32 %s49, 1
      %p53 = scmp.eq.s32.totalorder %s15, 1
      %p54 = scmp.ne.s32.totalorder %s49, %s51
      %p55 = scmp.eq.s32.totalorder %s15, 0
      %p56 = por %p54, %p55
      %p57 = scmp.ne.s32.totalorder %s49, %s51
      %p58 = scmp.eq.s32.totalorder %s20, 1
      %p59 = por %p57, %p58
      %p60 = scmp.ne.s32.totalorder %s51, %s52
      %p61 = scmp.eq.s32.totalorder %s20, 0
      %p62 = por %p60, %p61
      %p63 = scmp.ne.s32.totalorder %s51, %s52
      %p64 = scmp.eq.s32.totalorder %s21, 1
      %p65 = por %p63, %p64
      %p67 = scmp.ne.s32.totalorder %s52, %s66
      %p68 = scmp.eq.s32.totalorder %s21, 0
      %p69 = por %p67, %p68
      %s71 = sadd.s32 %s70, 1
      %p74 = scmp.eq.s32.totalorder %s15, 1
      %p75 = scmp.ne.s32.totalorder %s70, %s72
      %p76 = scmp.eq.s32.totalorder %s15, 0
      %p77 = por %p75, %p76
      %p78 = scmp.ne.s32.totalorder %s70, %s72
      %p79 = scmp.eq.s32.totalorder %s20, 1
      %p80 = por %p78, %p79
      %p81 = scmp.ne.s32.totalorder %s72, %s73
      %p82 = scmp.eq.s32.totalorder %s20, 0
      %p83 = por %p81, %p82
      %p84 = scmp.ne.s32.totalorder %s72, %s73
      %p85 = scmp.eq.s32.totalorder %s21, 1
      %p86 = por %p84, %p85
      %p88 = scmp.ne.s32.totalorder %s73, %s87
      %p89 = scmp.eq.s32.totalorder %s21, 0
      %p90 = por %p88, %p89
      %s91 = ssub.s32 %s15, %s22
      %p92 = scmp.eq.s32.totalorder %s91, 0
      %s94 = sadd.s32 %s93, 1
      %s95 = scalar_select %p92, %s93, %s94
      %p98 = pneg %p92
      %p99 = scmp.eq.s32.totalorder %s15, 1
      %p100 = por %p98, %p99
      %p101 = scmp.ne.s32.totalorder %s93, %s96
      %p102 = scmp.eq.s32.totalorder %s15, 0
      %p103 = por %p101, %p102
      %p104 = scmp.ne.s32.totalorder %s93, %s96
      %p105 = scmp.eq.s32.totalorder %s20, 1
      %p106 = por %p104, %p105
      %p107 = scmp.ne.s32.totalorder %s96, %s97
      %p108 = scmp.eq.s32.totalorder %s20, 0
      %p109 = por %p107, %p108
      %p110 = scmp.ne.s32.totalorder %s96, %s97
      %p111 = scmp.eq.s32.totalorder %s21, 1
      %p112 = por %p110, %p111
      %p114 = scmp.ne.s32.totalorder %s97, %s113
      %p115 = scmp.eq.s32.totalorder %s21, 0
      %p116 = por %p114, %p115
      %p117 = scmp.le.s32.totalorder 1, %s15
      %p118 = scmp.lt.s32.totalorder %s15, 3
      %p119 = pnand %p117, %p118
      %p120 = pneg %p119
      // Predicated region
      $region9: #{tpu_custom_call.1} parent=5 // pred_check
        _
      $region10: #{tpu_custom_call.1} parent=5 // pred_check_branch
        %122 = sbr.rel (%p119) target = $region12
      $region11: #{tpu_custom_call.1} parent=5 // pred_region
        %s123 = ssub.s32 %s15, 1
        // Predicated region
        $region13: #{tpu_custom_call.1} parent=11 // pred_check
          %p124 = pneg %p62
        $region14: #{tpu_custom_call.1} parent=11 // pred_check_branch
          %126 = sbr.rel (%p124) target = $region16
        $region15: #{tpu_custom_call.1} parent=11 // pred_region
          _
        $region16: #{tpu_custom_call.1} parent=11 // pred_fallthru
          _
        // Predicated region
        $region17: #{tpu_custom_call.1} parent=11 // pred_check
          %p127 = pneg %p83
        $region18: #{tpu_custom_call.1} parent=11 // pred_check_branch
          %129 = sbr.rel (%p127) target = $region20
        $region19: #{tpu_custom_call.1} parent=11 // pred_region
          _
        $region20: #{tpu_custom_call.1} parent=11 // pred_fallthru
          _
      $region12: #{tpu_custom_call.1} parent=5 // pred_fallthru
        _
      %p130 = scmp.lt.s32.totalorder %s15, 2
      // Predicated region
      $region21: #{tpu_custom_call.1} parent=5 // pred_check
        %p131 = pneg %p130
      $region22: #{tpu_custom_call.1} parent=5 // pred_check_branch
        %133 = sbr.rel (%p131) target = $region24
      $region23: #{tpu_custom_call.1} parent=5 // pred_region
        // Predicated region
        $region25: #{tpu_custom_call.1} parent=23 // pred_check
          %p134 = pneg %p35
        $region26: #{tpu_custom_call.1} parent=23 // pred_check_branch
          %136 = sbr.rel (%p134) target = $region28
        $region27: #{tpu_custom_call.1} parent=23 // pred_region
          %s137 = sand.u32 %s25, 1
          %s138 = scalar_lea.sflag [#allocation4], %s137
          %s139 = sand.u32 %s25, 1
          %s140 = smul.addr %s139, 16
          %s141 = scalar_lea.vmem [#allocation3], %s140
          %s143 = ssub.s32 256, 256
          %144 = vsyncadd %s138, %s143
          %s145 = smul.addr %s15, 4
          %s146 = smul.addr %s145, 64
          %s147 = scalar_lea.hbm %s0, %s146
          %s149 = sshll.u32 %s141, 4
          %s150 = int_to_ptr.vmem [resolvable:$true] %s149
          %152 = dma.hbm_to_vmem [thread:$0]  %s147, 256, %s150, %s138
        $region28: #{tpu_custom_call.1} parent=23 // pred_fallthru
          _
      $region24: #{tpu_custom_call.1} parent=5 // pred_fallthru
        _
      %p153 = scmp.le.s32.totalorder 1, %s15
      %p154 = scmp.lt.s32.totalorder %s15, 3
      %p155 = pnand %p153, %p154
      %p156 = pneg %p155
      // Predicated region
      $region29: #{tpu_custom_call.1} parent=5 // pred_check
        _
      $region30: #{tpu_custom_call.1} parent=5 // pred_check_branch
        %158 = sbr.rel (%p155) target = $region32
      $region31: #{tpu_custom_call.1} parent=5 // pred_region
        %s159 = ssub.s32 %s15, 1
        %s160 = sand.u32 %s28, 1
        %s161 = scalar_lea.sflag [#allocation4], %s160
        %s162 = sand.u32 %s28, 1
        %s163 = smul.addr %s162, 16
        %s164 = scalar_lea.vmem [#allocation3], %s163
        // Predicated region
        $region33: #{tpu_custom_call.1} parent=31 // pred_check
          %p165 = pneg %p41
        $region34: #{tpu_custom_call.1} parent=31 // pred_check_branch
          %167 = sbr.rel (%p165) target = $region36
        $region35: #{tpu_custom_call.1} parent=31 // pred_region
          %168 = dma.done %s161, 256
        $region36: #{tpu_custom_call.1} parent=31 // pred_fallthru
          _
        %s169 = sand.u32 %s28, 1
        %s170 = scalar_lea.sflag [#allocation4], %s169
        %s171 = sand.u32 %s28, 1
        %s172 = smul.addr %s171, 16
        %s173 = scalar_lea.vmem [#allocation3], %s172
        %p174 = pneg %p41
        %p175 = pneg %p38
        %p176 = pneg %p62
        %p177 = pneg %p59
        %p178 = pneg %p83
        %p179 = pneg %p80
        %p180 = pneg %p109
        %p181 = pneg %p106
        %s182 = sand.u32 %s96, 1
        %s183 = scalar_lea.sflag [#allocation5], %s182
        %s184 = sand.u32 %s96, 1
        %s185 = smul.addr %s184, 12
        %s186 = scalar_lea.vmem [#allocation6], %s185
        %187 = vst [vmem:[#allocation2] sm:$0xff] 0.0
        %188 = vst [vmem:[#allocation2 + $0x8] sm:$0xff] 0.0
        %189 = vst [vmem:[#allocation2 + $0x10] sm:$0xff] 0.0
        %190 = vst [vmem:[#allocation2 + $0x18] sm:$0xff] 0.0
        %191 = vst [vmem:[#allocation2 + $0x20] sm:$0xff] 0.0
        %192 = vst [vmem:[#allocation2 + $0x28] sm:$0xff] 0.0
        %193 = vst [vmem:[#allocation2 + $0x30] sm:$0xff] 0.0
        %194 = vst [vmem:[#allocation2 + $0x38] sm:$0xff] 0.0
        %195 = vst [vmem:[#allocation2 + $0x40] sm:$0xff] 0.0
        %196 = vst [vmem:[#allocation2 + $0x48] sm:$0xff] 0.0
        %197 = vst [vmem:[#allocation2 + $0x50] sm:$0xff] 0.0
        %198 = vst [vmem:[#allocation2 + $0x58] sm:$0xff] 0.0
        %199 = vst [vmem:[#allocation2 + $0x60] sm:$0xff] 0.0
        %200 = vst [vmem:[#allocation2 + $0x68] sm:$0xff] 0.0
        %201 = vst [vmem:[#allocation2 + $0x70] sm:$0xff] 0.0
        %202 = vst [vmem:[#allocation2 + $0x78] sm:$0xff] 0.0
        %203 = vst [vmem:[#allocation2 + $0x80] sm:$0xff] 0.0
        %204 = vst [vmem:[#allocation2 + $0x88] sm:$0xff] 0.0
        %205 = vst [vmem:[#allocation2 + $0x90] sm:$0xff] 0.0
        %206 = vst [vmem:[#allocation2 + $0x98] sm:$0xff] 0.0
        %207 = vst [vmem:[#allocation2 + $0xa0] sm:$0xff] 0.0
        %208 = vst [vmem:[#allocation2 + $0xa8] sm:$0xff] 0.0
        %209 = vst [vmem:[#allocation2 + $0xb0] sm:$0xff] 0.0
        %210 = vst [vmem:[#allocation2 + $0xb8] sm:$0xff] 0.0
        %211 = vst [vmem:[#allocation2 + $0xc0] sm:$0xff] 0.0
        %212 = vst [vmem:[#allocation2 + $0xc8] sm:$0xff] 0.0
        %213 = vst [vmem:[#allocation2 + $0xd0] sm:$0xff] 0.0
        %v214 = vld [vmem:[%s164] sm:$0xff]
        %v215 = vld [vmem:[%s164 + $0x8] sm:$0xff]
        %v218 = vcombine.high %v214, %v214
        %v219 = vcombine.high %v215, %v215
        %220 = vrot.lane.b32.xlu0 %v214, 111
        %v221 = vpop.permute.xlu0 %220
        %222 = vrot.lane.b32.xlu0 %v218, 111
        %v223 = vpop.permute.xlu0 %222
        %224 = vrot.lane.b32.xlu0 %v215, 111
        %v225 = vpop.permute.xlu0 %224
        %226 = vrot.lane.b32.xlu0 %v219, 111
        %v227 = vpop.permute.xlu0 %226
        %vm228 = vcmask 908288
        %v229 = vsel %vm228, %v221, %v223
        %v230 = vsel %vm228, %v223, %v225
        %v231 = vsel %vm228, %v225, %v227
        %235 = vst [vmem:[#allocation2] sm:$0xf] %v229
        %236 = vst [vmem:[#allocation2 + $0x8] sm:$0xf] %v230
        %237 = vst [vmem:[#allocation2 + $0x10] sm:$0xf] %v231
        %238 = vrot.lane.b32.xlu0 %v214, 110
        %v239 = vpop.permute.xlu0 %238
        %240 = vrot.lane.b32.xlu0 %v218, 110
        %v241 = vpop.permute.xlu0 %240
        %242 = vrot.lane.b32.xlu0 %v215, 110
        %v243 = vpop.permute.xlu0 %242
        %244 = vrot.lane.b32.xlu0 %v219, 110
        %v245 = vpop.permute.xlu0 %244
        %vm246 = vcmask 900096
        %v247 = vsel %vm246, %v239, %v241
        %v248 = vsel %vm246, %v241, %v243
        %v249 = vsel %vm246, %v243, %v245
        %253 = vst [vmem:[#allocation2 + $0x18] sm:$0xf] %v247
        %254 = vst [vmem:[#allocation2 + $0x20] sm:$0xf] %v248
        %255 = vst [vmem:[#allocation2 + $0x28] sm:$0xf] %v249
        %256 = vrot.lane.b32.xlu0 %v214, 109
        %v257 = vpop.permute.xlu0 %256
        %258 = vrot.lane.b32.xlu0 %v218, 109
        %v259 = vpop.permute.xlu0 %258
        %260 = vrot.lane.b32.xlu0 %v215, 109
        %v261 = vpop.permute.xlu0 %260
        %262 = vrot.lane.b32.xlu0 %v219, 109
        %v263 = vpop.permute.xlu0 %262
        %vm264 = vcmask 891904
        %v265 = vsel %vm264, %v257, %v259
        %v266 = vsel %vm264, %v259, %v261
        %v267 = vsel %vm264, %v261, %v263
        %271 = vst [vmem:[#allocation2 + $0x30] sm:$0xf] %v265
        %272 = vst [vmem:[#allocation2 + $0x38] sm:$0xf] %v266
        %273 = vst [vmem:[#allocation2 + $0x40] sm:$0xf] %v267
        %274 = vrot.lane.b32.xlu0 %v214, 93
        %v275 = vpop.permute.xlu0 %274
        %276 = vrot.lane.b32.xlu0 %v218, 93
        %v277 = vpop.permute.xlu0 %276
        %278 = vrot.lane.b32.xlu0 %v215, 93
        %v279 = vpop.permute.xlu0 %278
        %280 = vrot.lane.b32.xlu0 %v219, 93
        %v281 = vpop.permute.xlu0 %280
        %vm282 = vcmask 760832
        %v283 = vsel %vm282, %v275, %v277
        %v284 = vsel %vm282, %v277, %v279
        %v285 = vsel %vm282, %v279, %v281
        %289 = vst [vmem:[#allocation2 + $0x48] sm:$0xf] %v283
        %290 = vst [vmem:[#allocation2 + $0x50] sm:$0xf] %v284
        %291 = vst [vmem:[#allocation2 + $0x58] sm:$0xf] %v285
        %292 = vrot.lane.b32.xlu0 %v214, 92
        %v293 = vpop.permute.xlu0 %292
        %294 = vrot.lane.b32.xlu0 %v218, 92
        %v295 = vpop.permute.xlu0 %294
        %296 = vrot.lane.b32.xlu0 %v215, 92
        %v297 = vpop.permute.xlu0 %296
        %298 = vrot.lane.b32.xlu0 %v219, 92
        %v299 = vpop.permute.xlu0 %298
        %vm300 = vcmask 752640
        %v301 = vsel %vm300, %v293, %v295
        %v302 = vsel %vm300, %v295, %v297
        %v303 = vsel %vm300, %v297, %v299
        %307 = vst [vmem:[#allocation2 + $0x60] sm:$0xf] %v301
        %308 = vst [vmem:[#allocation2 + $0x68] sm:$0xf] %v302
        %309 = vst [vmem:[#allocation2 + $0x70] sm:$0xf] %v303
        %310 = vrot.lane.b32.xlu0 %v214, 91
        %v311 = vpop.permute.xlu0 %310
        %312 = vrot.lane.b32.xlu0 %v218, 91
        %v313 = vpop.permute.xlu0 %312
        %314 = vrot.lane.b32.xlu0 %v215, 91
        %v315 = vpop.permute.xlu0 %314
        %316 = vrot.lane.b32.xlu0 %v219, 91
        %v317 = vpop.permute.xlu0 %316
        %vm318 = vcmask 744448
        %v319 = vsel %vm318, %v311, %v313
        %v320 = vsel %vm318, %v313, %v315
        %v321 = vsel %vm318, %v315, %v317
        %325 = vst [vmem:[#allocation2 + $0x78] sm:$0xf] %v319
        %326 = vst [vmem:[#allocation2 + $0x80] sm:$0xf] %v320
        %327 = vst [vmem:[#allocation2 + $0x88] sm:$0xf] %v321
        %328 = vrot.lane.b32.xlu0 %v214, 75
        %v329 = vpop.permute.xlu0 %328
        %330 = vrot.lane.b32.xlu0 %v218, 75
        %v331 = vpop.permute.xlu0 %330
        %332 = vrot.lane.b32.xlu0 %v215, 75
        %v333 = vpop.permute.xlu0 %332
        %334 = vrot.lane.b32.xlu0 %v219, 75
        %v335 = vpop.permute.xlu0 %334
        %vm336 = vcmask 613376
        %v337 = vsel %vm336, %v329, %v331
        %v338 = vsel %vm336, %v331, %v333
        %v339 = vsel %vm336, %v333, %v335
        %343 = vst [vmem:[#allocation2 + $0x90] sm:$0xf] %v337
        %344 = vst [vmem:[#allocation2 + $0x98] sm:$0xf] %v338
        %345 = vst [vmem:[#allocation2 + $0xa0] sm:$0xf] %v339
        %346 = vrot.lane.b32.xlu0 %v214, 74
        %v347 = vpop.permute.xlu0 %346
        %348 = vrot.lane.b32.xlu0 %v218, 74
        %v349 = vpop.permute.xlu0 %348
        %350 = vrot.lane.b32.xlu0 %v215, 74
        %v351 = vpop.permute.xlu0 %350
        %352 = vrot.lane.b32.xlu0 %v219, 74
        %v353 = vpop.permute.xlu0 %352
        %vm354 = vcmask 605184
        %v355 = vsel %vm354, %v347, %v349
        %v356 = vsel %vm354, %v349, %v351
        %v357 = vsel %vm354, %v351, %v353
        %361 = vst [vmem:[#allocation2 + $0xa8] sm:$0xf] %v355
        %362 = vst [vmem:[#allocation2 + $0xb0] sm:$0xf] %v356
        %363 = vst [vmem:[#allocation2 + $0xb8] sm:$0xf] %v357
        %364 = vrot.lane.b32.xlu0 %v214, 73
        %v365 = vpop.permute.xlu0 %364
        %366 = vrot.lane.b32.xlu0 %v218, 73
        %v367 = vpop.permute.xlu0 %366
        %368 = vrot.lane.b32.xlu0 %v215, 73
        %v369 = vpop.permute.xlu0 %368
        %370 = vrot.lane.b32.xlu0 %v219, 73
        %v371 = vpop.permute.xlu0 %370
        %vm372 = vcmask 596992
        %v373 = vsel %vm372, %v365, %v367
        %v374 = vsel %vm372, %v367, %v369
        %v375 = vsel %vm372, %v369, %v371
        %379 = vst [vmem:[#allocation2 + $0xc0] sm:$0xf] %v373
        %380 = vst [vmem:[#allocation2 + $0xc8] sm:$0xf] %v374
        %381 = vst [vmem:[#allocation2 + $0xd0] sm:$0xf] %v375
        %v382 = vld [vmem:[%s1] sm:$0xf]
        %v383 = vld [vmem:[#allocation2] sm:$0xff]
        %v384 = vld [vmem:[#allocation2 + $0x8] sm:$0xff]
        %v385 = vld [vmem:[#allocation2 + $0x10] sm:$0xff]
        %v386 = vld [vmem:[#allocation2 + $0x18] sm:$0xff]
        %v387 = vld [vmem:[#allocation2 + $0x20] sm:$0xff]
        %v388 = vld [vmem:[#allocation2 + $0x28] sm:$0xff]
        %v389 = vld [vmem:[#allocation2 + $0x30] sm:$0xff]
        %v390 = vld [vmem:[#allocation2 + $0x38] sm:$0xff]
        %v391 = vld [vmem:[#allocation2 + $0x40] sm:$0xff]
        %v392 = vld [vmem:[#allocation2 + $0x48] sm:$0xff]
        %v393 = vld [vmem:[#allocation2 + $0x50] sm:$0xff]
        %v394 = vld [vmem:[#allocation2 + $0x58] sm:$0xff]
        %v395 = vld [vmem:[#allocation2 + $0x60] sm:$0xff]
        %v396 = vld [vmem:[#allocation2 + $0x68] sm:$0xff]
        %v397 = vld [vmem:[#allocation2 + $0x70] sm:$0xff]
        %v398 = vld [vmem:[#allocation2 + $0x78] sm:$0xff]
        %v399 = vld [vmem:[#allocation2 + $0x80] sm:$0xff]
        %v400 = vld [vmem:[#allocation2 + $0x88] sm:$0xff]
        %v401 = vld [vmem:[#allocation2 + $0x90] sm:$0xff]
        %v402 = vld [vmem:[#allocation2 + $0x98] sm:$0xff]
        %v403 = vld [vmem:[#allocation2 + $0xa0] sm:$0xff]
        %v404 = vld [vmem:[#allocation2 + $0xa8] sm:$0xff]
        %v405 = vld [vmem:[#allocation2 + $0xb0] sm:$0xff]
        %v406 = vld [vmem:[#allocation2 + $0xb8] sm:$0xff]
        %v407 = vld [vmem:[#allocation2 + $0xc0] sm:$0xff]
        %v408 = vld [vmem:[#allocation2 + $0xc8] sm:$0xff]
        %v409 = vld [vmem:[#allocation2 + $0xd0] sm:$0xff]
        %v410 = vld [vmem:[%s2] sm:$0xf]
        %412 = vset.pattern.permute.xlu0 0
        %413 = vperm.xlu0 %412, %v410
        %v414 = vpop.permute.xlu0 %413
        %vm416 = vcmask 588800
        %v418 = vsel %vm416, %v382, 0
        %420 = vmatprep.subr.mxu0 %v384
        %421 = vmatpush1.msra.mxu0 %v383
        %422 = vmatprep.subr.mxu0 %v387
        %423 = vmatpush1.msra.mxu0 %v386
        %424 = vmatprep.subr.mxu0 %v390
        %425 = vmatpush1.msra.mxu0 %v389
        %426 = vmatprep.subr.mxu0 %v393
        %427 = vmatpush1.msra.mxu0 %v392
        %428 = vmatprep.subr.mxu0 %v396
        %429 = vmatpush1.msra.mxu0 %v395
        %430 = vmatprep.subr.mxu0 %v399
        %431 = vmatpush1.msra.mxu0 %v398
        %432 = vmatprep.subr.mxu0 %v402
        %433 = vmatpush1.msra.mxu0 %v401
        %434 = vmatprep.subr.mxu0 %v405
        %435 = vmatpush1.msra.mxu0 %v404
        %436 = vmatprep.subr.mxu0 %v408
        %437 = vmatpush1.msra.mxu0 %v407
        %438 = vmatprep.subr.mxu0 0.0
        %439 = vmatpush1.msra.mxu0 0.0
        %440 = vmatprep.subr.mxu0 0.0
        %441 = vmatpush1.msra.mxu0 0.0
        %442 = vmatprep.subr.mxu0 0.0
        %443 = vmatpush1.msra.mxu0 0.0
        %444 = vmatprep.subr.mxu0 0.0
        %445 = vmatpush1.msra.mxu0 0.0
        %446 = vmatprep.subr.mxu0 0.0
        %447 = vmatpush1.msra.mxu0 0.0
        %448 = vmatprep.subr.mxu0 0.0
        %449 = vmatpush1.msra.mxu0 0.0
        %450 = vmatprep.subr.mxu0 0.0
        %451 = vmatpush1.msra.mxu0 0.0
        %452 = vmatprep.subr.mxu0 0.0
        %453 = vmatpush1.msra.mxu0 0.0
        %454 = vmatprep.subr.mxu0 0.0
        %455 = vmatpush1.msra.mxu0 0.0
        %456 = vmatprep.subr.mxu0 0.0
        %457 = vmatpush1.msra.mxu0 0.0
        %458 = vmatprep.subr.mxu0 0.0
        %459 = vmatpush1.msra.mxu0 0.0
        %460 = vmatprep.subr.mxu0 0.0
        %461 = vmatpush1.msra.mxu0 0.0
        %462 = vmatprep.subr.mxu0 0.0
        %463 = vmatpush1.msra.mxu0 0.0
        %464 = vmatprep.subr.mxu0 0.0
        %465 = vmatpush1.msra.mxu0 0.0
        %466 = vmatprep.subr.mxu0 0.0
        %467 = vmatpush1.msra.mxu0 0.0
        %468 = vmatprep.subr.mxu0 0.0
        %469 = vmatpush1.msra.mxu0 0.0
        %470 = vmatprep.subr.mxu0 0.0
        %471 = vmatpush1.msra.mxu0 0.0
        %472 = vmatprep.subr.mxu0 0.0
        %473 = vmatpush1.msra.mxu0 0.0
        %474 = vmatprep.subr.mxu0 0.0
        %475 = vmatpush1.msra.mxu0 0.0
        %476 = vmatprep.subr.mxu0 0.0
        %477 = vmatpush1.msra.mxu0 0.0
        %478 = vmatprep.subr.mxu0 0.0
        %479 = vmatpush1.msra.mxu0 0.0
        %480 = vmatprep.subr.mxu0 0.0
        %481 = vmatpush1.msra.mxu0 0.0
        %482 = vmatprep.subr.mxu0 0.0
        %483 = vmatpush1.msra.mxu0 0.0
        %484 = vmatprep.mubr.f32.mxu0 0.0
        %485 = vmatmul.mubr.f32.gmra.mrb[0].mxu0 %v418
        %v486 = vpop.f32.mrb[0].mxu0
        %v487 = vadd.f32 %v414, %v486
        %v488 = vpop.f32.mrb[0].mxu0
        %v489 = vadd.f32 %v414, %v488
        %490 = vdwg.mxu0
        %491 = vmatprep.subr.mxu0 0.0
        %492 = vmatpush1.msra.mxu0 %v385
        %493 = vmatprep.subr.mxu0 0.0
        %494 = vmatpush1.msra.mxu0 %v388
        %495 = vmatprep.subr.mxu0 0.0
        %496 = vmatpush1.msra.mxu0 %v391
        %497 = vmatprep.subr.mxu0 0.0
        %498 = vmatpush1.msra.mxu0 %v394
        %499 = vmatprep.subr.mxu0 0.0
        %500 = vmatpush1.msra.mxu0 %v397
        %501 = vmatprep.subr.mxu0 0.0
        %502 = vmatpush1.msra.mxu0 %v400
        %503 = vmatprep.subr.mxu0 0.0
        %504 = vmatpush1.msra.mxu0 %v403
        %505 = vmatprep.subr.mxu0 0.0
        %506 = vmatpush1.msra.mxu0 %v406
        %507 = vmatprep.subr.mxu0 0.0
        %508 = vmatpush1.msra.mxu0 %v409
        %509 = vmatprep.subr.mxu0 0.0
        %510 = vmatpush1.msra.mxu0 0.0
        %511 = vmatprep.subr.mxu0 0.0
        %512 = vmatpush1.msra.mxu0 0.0
        %513 = vmatprep.subr.mxu0 0.0
        %514 = vmatpush1.msra.mxu0 0.0
        %515 = vmatprep.subr.mxu0 0.0
        %516 = vmatpush1.msra.mxu0 0.0
        %517 = vmatprep.subr.mxu0 0.0
        %518 = vmatpush1.msra.mxu0 0.0
        %519 = vmatprep.subr.mxu0 0.0
        %520 = vmatpush1.msra.mxu0 0.0
        %521 = vmatprep.subr.mxu0 0.0
        %522 = vmatpush1.msra.mxu0 0.0
        %523 = vmatprep.subr.mxu0 0.0
        %524 = vmatpush1.msra.mxu0 0.0
        %525 = vmatprep.subr.mxu0 0.0
        %526 = vmatpush1.msra.mxu0 0.0
        %527 = vmatprep.subr.mxu0 0.0
        %528 = vmatpush1.msra.mxu0 0.0
        %529 = vmatprep.subr.mxu0 0.0
        %530 = vmatpush1.msra.mxu0 0.0
        %531 = vmatprep.subr.mxu0 0.0
        %532 = vmatpush1.msra.mxu0 0.0
        %533 = vmatprep.subr.mxu0 0.0
        %534 = vmatpush1.msra.mxu0 0.0
        %535 = vmatprep.subr.mxu0 0.0
        %536 = vmatpush1.msra.mxu0 0.0
        %537 = vmatprep.subr.mxu0 0.0
        %538 = vmatpush1.msra.mxu0 0.0
        %539 = vmatprep.subr.mxu0 0.0
        %540 = vmatpush1.msra.mxu0 0.0
        %541 = vmatprep.subr.mxu0 0.0
        %542 = vmatpush1.msra.mxu0 0.0
        %543 = vmatprep.subr.mxu0 0.0
        %544 = vmatpush1.msra.mxu0 0.0
        %545 = vmatprep.subr.mxu0 0.0
        %546 = vmatpush1.msra.mxu0 0.0
        %547 = vmatprep.subr.mxu0 0.0
        %548 = vmatpush1.msra.mxu0 0.0
        %549 = vmatprep.subr.mxu0 0.0
        %550 = vmatpush1.msra.mxu0 0.0
        %551 = vmatprep.subr.mxu0 0.0
        %552 = vmatpush1.msra.mxu0 0.0
        %553 = vmatprep.subr.mxu0 0.0
        %554 = vmatpush1.msra.mxu0 0.0
        %555 = vmatprep.mubr.f32.mxu0 0.0
        %556 = vmatmul.mubr.f32.gmra.mrb[0].mxu0 %v418
        %v557 = vpop.f32.mrb[0].mxu0
        %v558 = vadd.f32 %v414, %v557
        %v559 = vpop.f32.mrb[0].mxu0
        %560 = vdwg.mxu0
        %v561 = vmax.f32 %v487, 0.0
        %v562 = vmax.f32 %v489, 0.0
        %v563 = vmax.f32 %v558, 0.0
        %v564 = vmin.f32 %v561, 1.0
        %v565 = vmin.f32 %v562, 1.0
        %v566 = vmin.f32 %v563, 1.0
        %v569 = vcombine.low %v564, %v565
        %571 = vst [vmem:[%s186] sm:$0xff] %v569
        %572 = vst [vmem:[%s186 + $0x8] sm:$0xf] %v566
        %s573 = sand.u32 %s96, 1
        %s574 = scalar_lea.sflag [#allocation5], %s573
        %s575 = sand.u32 %s96, 1
        %s576 = smul.addr %s575, 12
        %s577 = scalar_lea.vmem [#allocation6], %s576
        // Predicated region
        $region37: #{tpu_custom_call.1} parent=31 // pred_check
          %p578 = pneg %p106
        $region38: #{tpu_custom_call.1} parent=31 // pred_check_branch
          %580 = sbr.rel (%p578) target = $region40
        $region39: #{tpu_custom_call.1} parent=31 // pred_region
          %s582 = ssub.s32 192, 192
          %583 = vsyncadd %s574, %s582
          %s584 = smul.addr %s20, 3
          %s585 = smul.addr %s584, 64
          %s586 = scalar_lea.hbm %s3, %s585
          %s588 = sshll.u32 %s577, 4
          %s589 = int_to_ptr.vmem [resolvable:$true] %s588
          %591 = dma.vmem_to_hbm [thread:$0]  %s589, 192, %s586, %s574
        $region40: #{tpu_custom_call.1} parent=31 // pred_fallthru
          _
      $region32: #{tpu_custom_call.1} parent=5 // pred_fallthru
        _
      %p592 = scmp.le.s32.totalorder 2, %s15
      // Predicated region
      $region41: #{tpu_custom_call.1} parent=5 // pred_check
        %p593 = pneg %p592
      $region42: #{tpu_custom_call.1} parent=5 // pred_check_branch
        %595 = sbr.rel (%p593) target = $region44
      $region43: #{tpu_custom_call.1} parent=5 // pred_region
        %s596 = ssub.s32 %s15, 2
        // Predicated region
        $region45: #{tpu_custom_call.1} parent=43 // pred_check
          %p597 = pneg %p112
        $region46: #{tpu_custom_call.1} parent=43 // pred_check_branch
          %599 = sbr.rel (%p597) target = $region48
        $region47: #{tpu_custom_call.1} parent=43 // pred_region
          %s600 = sand.u32 %s97, 1
          %s601 = scalar_lea.sflag [#allocation5], %s600
          %s602 = sand.u32 %s97, 1
          %s603 = smul.addr %s602, 12
          %s604 = scalar_lea.vmem [#allocation6], %s603
          %605 = dma.done %s601, 192
        $region48: #{tpu_custom_call.1} parent=43 // pred_fallthru
          _
      $region44: #{tpu_custom_call.1} parent=5 // pred_fallthru
        _
    $region6: #{tpu_custom_call.1} parent=1 // loop_footer
      %s19 = sadd.s32 1, %s15
    $region7: #{tpu_custom_call.1} parent=1 // loop_footer_branch
      %14 = sbr.rel target = $region3
    $region8: #{tpu_custom_call.1} parent=1 // loop_exit
      _
    %606 = vsyncpa [#allocation4], 1
    %s607 = scalar_lea.sflag [#allocation4], 1
    %608 = vsyncpa %s607, 1
    %609 = vsyncpa [#allocation5], 1
    %s610 = scalar_lea.sflag [#allocation5], 1
    %611 = vsyncpa %s610, 1

</llo_original>
